<compile_context>
chip_gen: v6e
topology: v6e:2x2x1
jax: 0.10.0
libtpu: 0.0.40
codegen_flags: <defaults>
</compile_context>

<pallas_src>
from functools import partial

import jax
import jax.numpy as jnp
from jax.experimental import pallas as pl
from jax.experimental.pallas import tpu as pltpu


def _normalize_kernel(x_ref, scale_ref, bias_ref, o_ref, *, rows, resident):
    # x_ref/o_ref: (rows, cols); scale_ref/bias_ref: (NC_pad, 1) f32 when
    # resident (sliced here), else per-block (rows, 1) f32.
    if resident:
        r0 = pl.multiple_of(pl.program_id(0) * rows, rows)
        s = scale_ref[pl.ds(r0, rows), :]
        b = bias_ref[pl.ds(r0, rows), :]
    else:
        s = scale_ref[...]
        b = bias_ref[...]
    # Compute in f32 (exact for f32 inputs, preserves precision for bf16).
    x = x_ref[...].astype(jnp.float32)
    o_ref[...] = (x * s + b).astype(o_ref.dtype)


def normalize_layer(x, mean, std):
    """(x - mean[c]) / std[c] with mean/std broadcast over (H, W); x is NCHW."""
    N, C, H, W = x.shape
    NC, HW = N * C, H * W
    itemsize = jnp.dtype(x.dtype).itemsize

    mean_f = jnp.asarray(mean, jnp.float32).reshape(C)
    std_f = jnp.asarray(std, jnp.float32).reshape(C)
    # TODO(synk): no guard against std == 0 (inf/NaN propagates), matching the
    # PyTorch layer; the folded reciprocal+FMA is not bit-identical to sub/div.
    scale_c = 1.0 / std_f                  # per-channel reciprocal (f32)
    bias_c = -mean_f * scale_c             # per-channel bias (f32)

    # Dtype-aware sublane multiple: 8 for f32, 16 for bf16, 32 for int8/fp8.
    sub = 8 * max(1, 4 // itemsize)

    # Lane-dense padding of the plane dim (avoids masked vst.msk for 7x7 etc.).
    HW_pad = max(128, ((HW + 127) // 128) * 128)

    BLOCK_TARGET = 4 * 1024 * 1024         # ~4 MiB per input block
    row_bytes = HW_pad * itemsize

    if sub * row_bytes > BLOCK_TARGET and HW_pad > 128:
        # Very large planes: tile the lane dim too so blocks stay ~4 MiB.
        rows = sub
        cols = max(128, ((BLOCK_TARGET // (rows * itemsize)) // 128) * 128)
        cols = min(cols, HW_pad)
    else:
        cols = HW_pad
        rows = max(sub, ((BLOCK_TARGET // row_bytes) // sub) * sub)
        rows = min(rows, ((NC + sub - 1) // sub) * sub)
        # Guarantee >= 2 row blocks when possible so "parallel" semantics can
        # shard the grid across both v7x TensorCores.
        if NC >= 2 * sub:
            rows = min(rows, max(sub, ((NC // 2) // sub) * sub))

    NC_pad = ((NC + rows - 1) // rows) * rows
    grid = (NC_pad // rows, (HW_pad + cols - 1) // cols)

    # Per-row (one row == one (n, c) plane) scale/bias, padded to NC_pad.
    scale = jnp.tile(scale_c, N)
    bias = jnp.tile(bias_c, N)
    if NC_pad > NC:
        scale = jnp.concatenate([scale, jnp.ones((NC_pad - NC,), jnp.float32)])
        bias = jnp.concatenate([bias, jnp.zeros((NC_pad - NC,), jnp.float32)])
    scale = scale.reshape(NC_pad, 1)
    bias = bias.reshape(NC_pad, 1)

    x2 = x.reshape(NC, HW)
    if NC_pad > NC or HW_pad > HW:
        # TODO(synk): one padding copy for alignment-odd shapes (e.g. 7x7
        # planes / ragged NC); a no-op for typical aligned inputs.
        x2 = jnp.pad(x2, ((0, NC_pad - NC), (0, HW_pad - HW)))

    # Keep scale/bias VMEM-resident across the whole grid when tiny; fall back
    # to per-block tiles if NC is huge.
    resident = NC_pad * 4 <= 2 * 1024 * 1024
    if resident:
        sb_spec = pl.BlockSpec((NC_pad, 1), lambda i, j: (0, 0))
    else:
        sb_spec = pl.BlockSpec((rows, 1), lambda i, j: (i, 0))

    out2 = pl.pallas_call(
        partial(_normalize_kernel, rows=rows, resident=resident),
        out_shape=jax.ShapeDtypeStruct((NC_pad, HW_pad), x.dtype),
        grid=grid,
        in_specs=[
            pl.BlockSpec((rows, cols), lambda i, j: (i, j)),   # x tile
            sb_spec,                                           # scale
            sb_spec,                                           # bias
        ],
        out_specs=pl.BlockSpec((rows, cols), lambda i, j: (i, j)),
        compiler_params=pltpu.CompilerParams(
            # No reduction axes; both axes megacore-shardable.
            dimension_semantics=("parallel", "parallel"),
            # 4 MiB blocks -> ~16-20 MiB resident double-buffered; raise the
            # scoped-VMEM limit explicitly so v5e's 16 MiB default is not an
            # issue (40 MiB is within physical VMEM on v5e/v6e/v7x).
            vmem_limit_bytes=40 * 1024 * 1024,
        ),
    )(x2, scale, bias)

    if NC_pad > NC or HW_pad > HW:
        out2 = out2[:NC, :HW]
    return out2.reshape(N, C, H, W)


if __name__ == "__main__":
    key = jax.random.PRNGKey(0)
    N, C, H, W = 2, 4, 16, 16
    x = jax.random.normal(key, (N, C, H, W), dtype=jnp.float32)

    # Deterministic per-channel parameters (CIFAR-style values, 4 channels).
    mean = jnp.array([0.4914, 0.4822, 0.4465, 0.4500], dtype=jnp.float32)
    std = jnp.array([0.2470, 0.2435, 0.2616, 0.2500], dtype=jnp.float32)

    out = normalize_layer(x, mean, std)
    out = jax.block_until_ready(out)

    # Reference check in plain JAX (broadcast mean/std over H, W).
    ref = (x - mean[None, :, None, None]) / std[None, :, None, None]
    assert jnp.allclose(out, ref, atol=1e-5, rtol=1e-5), "mismatch vs reference"

    print("KERNEL_OK")
</pallas_src>

<mosaic_0001>
module attributes {stable_mosaic.version = 11 : i64} {
  func.func @_normalize_kernel(%arg0: i32, %arg1: i32, %arg2: memref<8x256xf32, #tpu.memory_space<vmem>>, %arg3: memref<8x1xf32, #tpu.memory_space<vmem>>, %arg4: memref<8x1xf32, #tpu.memory_space<vmem>>, %arg5: memref<8x256xf32, #tpu.memory_space<vmem>>) attributes {dimension_semantics = [#tpu.dimension_semantics<parallel>, #tpu.dimension_semantics<parallel>], iteration_bounds = array<i64: 1, 1>, scalar_prefetch = 0 : i64, scratch_operands = 0 : i64, tpu.core_type = #tpu.core_type<tc>, window_params = [{transform_indices = @transform_0, window_bounds = array<i64: 8, 256>}, {pipeline_mode = #tpu.pipeline_mode<synchronous>, transform_indices = @transform_1, window_bounds = array<i64: 8, 1>}, {pipeline_mode = #tpu.pipeline_mode<synchronous>, transform_indices = @transform_2, window_bounds = array<i64: 8, 1>}, {transform_indices = @transform_3, window_bounds = array<i64: 8, 256>}]} {
    %c8_i32 = arith.constant 8 : i32
    %0 = arith.muli %arg0, %c8_i32 : i32
    %1 = tpu.assume_multiple %0, 8 : i32
    %2 = arith.index_cast %1 : i32 to index
    %c0 = arith.constant 0 : index
    %3 = vector.load %arg3[%2, %c0] : memref<8x1xf32, #tpu.memory_space<vmem>>, vector<8x1xf32>
    %4 = arith.index_cast %1 : i32 to index
    %c0_0 = arith.constant 0 : index
    %5 = vector.load %arg4[%4, %c0_0] : memref<8x1xf32, #tpu.memory_space<vmem>>, vector<8x1xf32>
    %c0_1 = arith.constant 0 : index
    %c0_2 = arith.constant 0 : index
    %6 = vector.load %arg2[%c0_1, %c0_2] : memref<8x256xf32, #tpu.memory_space<vmem>>, vector<8x256xf32>
    %7 = vector.broadcast %3 : vector<8x1xf32> to vector<8x256xf32>
    %8 = arith.mulf %6, %7 : vector<8x256xf32>
    %9 = vector.broadcast %5 : vector<8x1xf32> to vector<8x256xf32>
    %10 = arith.addf %8, %9 : vector<8x256xf32>
    %c0_3 = arith.constant 0 : index
    %c0_4 = arith.constant 0 : index
    %11 = vector.load %arg5[%c0_3, %c0_4] : memref<8x256xf32, #tpu.memory_space<vmem>>, vector<8x256xf32>
    tpu.vector_store %arg5[%c0_3, %c0_4], %10 {strides = array<i32>} : memref<8x256xf32, #tpu.memory_space<vmem>>, vector<8x256xf32>,
    return
  }
  func.func @transform_0(%arg0: i32, %arg1: i32) -> (i32, i32) {
    %c0_i32 = arith.constant 0 : i32
    return %arg0, %arg1 : i32, i32
  }
  func.func @transform_1(%arg0: i32, %arg1: i32) -> (i32, i32) {
    %c0_i32 = arith.constant 0 : i32
    %c0_i32_0 = arith.constant 0 : i32
    %c0_i32_1 = arith.constant 0 : i32
    return %c0_i32, %c0_i32_0 : i32, i32
  }
  func.func @transform_2(%arg0: i32, %arg1: i32) -> (i32, i32) {
    %c0_i32 = arith.constant 0 : i32
    %c0_i32_0 = arith.constant 0 : i32
    %c0_i32_1 = arith.constant 0 : i32
    return %c0_i32, %c0_i32_0 : i32, i32
  }
  func.func @transform_3(%arg0: i32, %arg1: i32) -> (i32, i32) {
    %c0_i32 = arith.constant 0 : i32
    return %arg0, %arg1 : i32, i32
  }
}

</mosaic_0001>

<llo_original>
// kernel: tpu_custom_call.1
$region0: #{tpu_custom_call.1}
  #allocation0 [shape = 'u32[]', space=smem, size = 0x4, offset = 0x4, fixed_abs, tag = 'smem constant byte address 0x4 - core index']
  #allocation1 [shape = 'u32[144,128]{1,0:T(1,128)}', space=vmem, size = 0x12000, scoped, tag = 'internal scratch']
  %s0 = inlined_call_operand.vmem [shape: f32[8,256], index: 0, kind: input, shape index: {}]
  %s1 = inlined_call_operand.vmem [shape: f32[8,1], index: 1, kind: input, shape index: {}]
  %s2 = inlined_call_operand.vmem [shape: f32[8,1], index: 2, kind: input, shape index: {}]
  %s3 = inlined_call_operand.hbm [shape: f32[8,256], index: 3, kind: output, shape index: {}]
  %s4 = sld [smem:[#allocation0]]
  $region22: #{tpu_custom_call.1} parent=0
    _
  %s6 = ssub.s32 1, %s4
  %s7 = scalar_select 0, %s6, %s4
  $region1: #{tpu_custom_call.1} parent=0
    #allocation2 [shape = 'u8[8192]{0}', space=vmem, size = 0x2000, scoped, tag = 'output window, operand 0, single buffered']
    #allocation3 [shape = 's32[1]{0}', space=sflag, size = 0x4, scoped, tag = 'scoped memory for tpu_custom_call.1']
    %8 = vsyncpa [#allocation3], 0
    // Predicated region
    $region2: #{tpu_custom_call.1} parent=1 // pred_check
      _
    $region3: #{tpu_custom_call.1} parent=1 // pred_check_branch
      %10 = sbr.rel (0) target = $region5
    $region4: #{tpu_custom_call.1} parent=1 // pred_region
      _
    $region5: #{tpu_custom_call.1} parent=1 // pred_fallthru
      _
    // Predicated region
    $region6: #{tpu_custom_call.1} parent=1 // pred_check
      _
    $region7: #{tpu_custom_call.1} parent=1 // pred_check_branch
      %12 = sbr.rel (0) target = $region9
    $region8: #{tpu_custom_call.1} parent=1 // pred_region
      _
    $region9: #{tpu_custom_call.1} parent=1 // pred_fallthru
      _
    // Predicated region
    $region10: #{tpu_custom_call.1} parent=1 // pred_check
      _
    $region11: #{tpu_custom_call.1} parent=1 // pred_check_branch
      %14 = sbr.rel (0) target = $region13
    $region12: #{tpu_custom_call.1} parent=1 // pred_region
      _
    $region13: #{tpu_custom_call.1} parent=1 // pred_fallthru
      _
    %s15 = smul.u32 0, 8
    %s16 = scalar_lea.vmem %s1, %s15
    %v17 = vld [vmem:[%s16] sm:$0xff]
    %s18 = scalar_lea.vmem %s2, %s15
    %v19 = vld [vmem:[%s18] sm:$0xff]
    %v20 = vld [vmem:[%s0] sm:$0xff]
    %v21 = vld [vmem:[%s0 + $0x8] sm:$0xff]
    %23 = vset.pattern.permute.xlu0 0
    %24 = vperm.xlu0 %23, %v17
    %v25 = vpop.permute.xlu0 %24
    %v27 = vmul.f32 %v20, %v25
    %v28 = vmul.f32 %v21, %v25
    %30 = vset.pattern.permute.xlu0 0
    %31 = vperm.xlu0 %30, %v19
    %v32 = vpop.permute.xlu0 %31
    %v34 = vadd.f32 %v27, %v32
    %v35 = vadd.f32 %v28, %v32
    %36 = vst [vmem:[#allocation2] sm:$0xff] %v34
    %37 = vst [vmem:[#allocation2 + $0x8] sm:$0xff] %v35
    // Predicated region
    $region14: #{tpu_custom_call.1} parent=1 // pred_check
      _
    $region15: #{tpu_custom_call.1} parent=1 // pred_check_branch
      %39 = sbr.rel (0) target = $region17
    $region16: #{tpu_custom_call.1} parent=1 // pred_region
      %s41 = ssub.s32 256, 256
      %42 = vsyncadd [#allocation3], %s41
      %s44 = sshll.u32 [#allocation2], 4
      %s45 = int_to_ptr.vmem [resolvable:$true] %s44
      %47 = dma.vmem_to_hbm [thread:$0]  %s45, 256, %s3, [#allocation3]
    $region17: #{tpu_custom_call.1} parent=1 // pred_fallthru
      _
    // Predicated region
    $region18: #{tpu_custom_call.1} parent=1 // pred_check
      _
    $region19: #{tpu_custom_call.1} parent=1 // pred_check_branch
      %49 = sbr.rel (0) target = $region21
    $region20: #{tpu_custom_call.1} parent=1 // pred_region
      %50 = dma.done [#allocation3], 256
    $region21: #{tpu_custom_call.1} parent=1 // pred_fallthru
      _
    %51 = vsyncpa [#allocation3], 1

</llo_original>
